<compile_context>
chip_gen: v7x
topology: tpu7x:2x2x1
jax: 0.10.0
libtpu: 0.0.40
codegen_flags: <defaults>
</compile_context>

<pallas_src>
import functools

import jax
import jax.numpy as jnp
from jax.experimental import pallas as pl
from jax.experimental.pallas import tpu as pltpu


def _round_up(v: int, m: int) -> int:
    return (v + m - 1) // m * m


def entity_embedding_kernel(idx_ref, tables_ref, out_ref, *, cat_pad):
    """One grid step over a tile of the batch.

    idx_ref:    (C, tile_n)            int32 categorical codes (batch tile, column-major)
    tables_ref: (C, cat_pad, emb_pad)  bf16  zero-padded embedding tables (VMEM-resident)
    out_ref:    (C, tile_n, emb_pad)   f32   lane-dense per-column embeddings
    """
    idx = idx_ref[...]                                             # (C, tile_n)
    c, tn = idx.shape
    iota = jax.lax.broadcasted_iota(jnp.int32, (c, tn, cat_pad), 2)
    # Single broadcasted compare builds all C one-hots in one VPU pass.
    one_hot = (idx[:, :, None] == iota).astype(jnp.bfloat16)       # (C, tile_n, cat_pad)
    # One fused batched MXU matmul: batch=C, K=cat_pad (128-aligned), f32 accumulation.
    out_ref[...] = jnp.einsum("cnk,cke->cne", one_hot, tables_ref[...],
                              preferred_element_type=jnp.float32)  # (C, tile_n, emb_pad)


class EntityEmbeddingBlockPallas:
    """Pallas equivalent of EntityEmbeddingBlock with embedding_sharing=False."""

    def __init__(self, cat_sizes, cat_emb_sizes, cat_idx, key, max_tile_n=512):
        if len(cat_sizes) != len(cat_emb_sizes):
            raise ValueError("cat_sizes and cat_emb_sizes must be the same length")
        if len(cat_idx) != len(cat_sizes):
            raise ValueError("cat_idx, cat_sizes and cat_emb_sizes must all match")

        self.cat_idx = tuple(int(i) for i in cat_idx)
        self.cat_sizes = tuple(int(s) for s in cat_sizes)
        self.emb_sizes = tuple(int(e) for e in cat_emb_sizes)
        self.output_size = sum(self.emb_sizes)

        # 128-aligned pads: lane-dense one-hot (K) and lane-dense output (emb_pad).
        self.cat_pad = _round_up(max(self.cat_sizes), 128)
        self.emb_pad = _round_up(max(self.emb_sizes), 128)
        # N-tile: multiple of 128, capped at 512 (fits v7x's 64 MiB per-TC VMEM).
        self.max_tile_n = max(128, _round_up(int(max_tile_n), 128))

        # Deterministic init mimicking torch.nn.Embedding default N(0, 1);
        # zero-padded, stored in bf16 (halves resident VMEM / DMA bytes).
        tables = []
        for i, (cs, es) in enumerate(zip(self.cat_sizes, self.emb_sizes)):
            k = jax.random.fold_in(key, i)
            w = jax.random.normal(k, (cs, es), dtype=jnp.float32)
            w = jnp.pad(w, ((0, self.cat_pad - cs), (0, self.emb_pad - es)))
            tables.append(w)
        self.tables = jnp.stack(tables, axis=0).astype(jnp.bfloat16)  # (C, cat_pad, emb_pad)

    def __call__(self, x):
        C = len(self.cat_idx)
        # x[:, cat_idx].long() semantics (truncation toward zero).  NOTE: no range
        # clamp — out-of-range codes produce an all-zero row (PyTorch would raise).
        x_cat_t = x[:, list(self.cat_idx)].astype(jnp.int32).T        # (C, N)
        n = x_cat_t.shape[1]

        tile_n = min(self.max_tile_n, _round_up(n, 128))
        n_pad = _round_up(n, tile_n)
        if n_pad != n:
            x_cat_t = jnp.pad(x_cat_t, ((0, 0), (0, n_pad - n)))      # index 0 is valid

        grid = (n_pad // tile_n,)

        # VMEM budget: resident tables + double-buffered idx/out tiles + one-hot temp.
        tables_bytes = self.tables.size * 2
        idx_tile_bytes = C * tile_n * 4
        out_tile_bytes = C * tile_n * self.emb_pad * 4
        onehot_bytes = C * tile_n * self.cat_pad * 2
        needed = (tables_bytes + 2 * idx_tile_bytes + 2 * out_tile_bytes
                  + onehot_bytes + (4 << 20))
        vmem_limit = int(min(max(needed, 16 << 20), 48 << 20))

        kernel = functools.partial(entity_embedding_kernel, cat_pad=self.cat_pad)

        out_full = pl.pallas_call(
            kernel,
            out_shape=jax.ShapeDtypeStruct((C, n_pad, self.emb_pad), jnp.float32),
            grid=grid,
            in_specs=[
                # Index tile: marches over the batch.
                pl.BlockSpec((C, tile_n), lambda i: (0, i)),
                # Tables: constant index_map -> stay resident in VMEM across grid steps.
                pl.BlockSpec((C, self.cat_pad, self.emb_pad), lambda i: (0, 0, 0)),
            ],
            # Lane-dense output tile (last dim = emb_pad, a multiple of 128).
            out_specs=pl.BlockSpec((C, tile_n, self.emb_pad), lambda i: (0, i, 0)),
            compiler_params=pltpu.CompilerParams(
                dimension_semantics=("parallel",),
                vmem_limit_bytes=vmem_limit,
            ),
        )(x_cat_t, self.tables)

        # Narrow per-column slice + concat (and unpadding) done as cheap XLA layout
        # work in the wrapper — keeps all in-kernel stores unmasked/128-aligned.
        parts = [out_full[c, :n, :sz] for c, sz in enumerate(self.emb_sizes)]
        return jnp.concatenate(parts, axis=1)                          # (N, output_size)


if __name__ == "__main__":
    key = jax.random.PRNGKey(0)

    # Small synthetic config: dataset has D=6 columns, 3 of which are categorical.
    cat_idx = [1, 3, 4]
    cat_sizes = [5, 7, 4]
    cat_emb_sizes = [3, 4, 5]          # output_size = 12
    N, D = 8, 6

    block = EntityEmbeddingBlockPallas(cat_sizes, cat_emb_sizes, cat_idx,
                                       key=jax.random.fold_in(key, 100))

    # Build x: (N, D) float tensor; categorical columns hold integer-valued codes.
    k_cont, *k_cats = jax.random.split(jax.random.fold_in(key, 200), 1 + len(cat_idx))
    x = jax.random.normal(k_cont, (N, D), dtype=jnp.float32)
    for kc, ci, cs in zip(k_cats, cat_idx, cat_sizes):
        codes = jax.random.randint(kc, (N,), 0, cs)
        x = x.at[:, ci].set(codes.astype(jnp.float32))

    out = block(x)
    out = jax.block_until_ready(out)

    # Pure-JAX reference (table lookup on the same bf16 tables, f32 output).
    x_cat = x[:, cat_idx].astype(jnp.int32)
    ref_parts = [block.tables[c, x_cat[:, c], :sz].astype(jnp.float32)
                 for c, sz in enumerate(cat_emb_sizes)]
    ref = jnp.concatenate(ref_parts, axis=1)

    assert out.shape == (N, sum(cat_emb_sizes)), out.shape
    assert jnp.allclose(out, ref, atol=1e-6), "mismatch vs reference"

    # TODO(synk): embedding_sharing=True path (single shared nn.Embedding) not implemented.
    print("KERNEL_OK")
</pallas_src>

<mosaic_0001>
module attributes {stable_mosaic.version = 11 : i64} {
  func.func @entity_embedding_kernel(%arg0: i32, %arg1: memref<3x128xi32, #tpu.memory_space<vmem>>, %arg2: memref<3x128x128xbf16, #tpu.memory_space<vmem>>, %arg3: memref<3x128x128xf32, #tpu.memory_space<vmem>>) attributes {dimension_semantics = [#tpu.dimension_semantics<parallel>], iteration_bounds = array<i64: 1>, scalar_prefetch = 0 : i64, scratch_operands = 0 : i64, tpu.core_type = #tpu.core_type<tc>, window_params = [{transform_indices = @transform_0, window_bounds = array<i64: 3, 128>}, {pipeline_mode = #tpu.pipeline_mode<synchronous>, transform_indices = @transform_1, window_bounds = array<i64: 3, 128, 128>}, {transform_indices = @transform_2, window_bounds = array<i64: 3, 128, 128>}]} {
    %c0 = arith.constant 0 : index
    %c0_0 = arith.constant 0 : index
    %0 = vector.load %arg1[%c0, %c0_0] : memref<3x128xi32, #tpu.memory_space<vmem>>, vector<3x128xi32>
    %1 = tpu.iota {dimensions = array<i32: 2>} : vector<3x128x128xi32>
    %2 = vector.shape_cast %0 : vector<3x128xi32> to vector<3x128x1xi32>
    %3 = vector.broadcast %2 : vector<3x128x1xi32> to vector<3x128x128xi32>
    %4 = arith.cmpi eq, %3, %1 : vector<3x128x128xi32>
    %5 = arith.extui %4 : vector<3x128x128xi1> to vector<3x128x128xi32>
    %6 = arith.sitofp %5 : vector<3x128x128xi32> to vector<3x128x128xf32>
    %7 = arith.truncf %6 : vector<3x128x128xf32> to vector<3x128x128xbf16>
    %c0_1 = arith.constant 0 : index
    %c0_2 = arith.constant 0 : index
    %c0_3 = arith.constant 0 : index
    %8 = vector.load %arg2[%c0_1, %c0_2, %c0_3] : memref<3x128x128xbf16, #tpu.memory_space<vmem>>, vector<3x128x128xbf16>
    "tpu.trace_start"() <{level = 10 : i32, message = "cnk,cke->cne"}> : () -> ()
    %cst = arith.constant dense<0.000000e+00> : vector<3x128x128xf32>
    %9 = tpu.matmul %7, %8, %cst {dimension_numbers = #tpu.dot_dimension_numbers<[2], [1], [1], [2], [0, 0, 0, 1, 1, 2], [0], [0]>} : vector<3x128x128xbf16>, vector<3x128x128xbf16>, vector<3x128x128xf32> -> vector<3x128x128xf32>
    "tpu.trace_stop"() : () -> ()
    %c0_4 = arith.constant 0 : index
    %c0_5 = arith.constant 0 : index
    %c0_6 = arith.constant 0 : index
    %10 = vector.load %arg3[%c0_4, %c0_5, %c0_6] : memref<3x128x128xf32, #tpu.memory_space<vmem>>, vector<3x128x128xf32>
    tpu.vector_store %arg3[%c0_4, %c0_5, %c0_6], %9 {strides = array<i32>} : memref<3x128x128xf32, #tpu.memory_space<vmem>>, vector<3x128x128xf32>,
    return
  }
  func.func @transform_0(%arg0: i32) -> (i32, i32) {
    %c0_i32 = arith.constant 0 : i32
    %c0_i32_0 = arith.constant 0 : i32
    return %c0_i32, %arg0 : i32, i32
  }
  func.func @transform_1(%arg0: i32) -> (i32, i32, i32) {
    %c0_i32 = arith.constant 0 : i32
    %c0_i32_0 = arith.constant 0 : i32
    %c0_i32_1 = arith.constant 0 : i32
    %c0_i32_2 = arith.constant 0 : i32
    return %c0_i32, %c0_i32_0, %c0_i32_1 : i32, i32, i32
  }
  func.func @transform_2(%arg0: i32) -> (i32, i32, i32) {
    %c0_i32 = arith.constant 0 : i32
    %c0_i32_0 = arith.constant 0 : i32
    %c0_i32_1 = arith.constant 0 : i32
    return %c0_i32, %arg0, %c0_i32_0 : i32, i32, i32
  }
}

</mosaic_0001>

<llo_original>
// kernel: tpu_custom_call.1
$region0: #{tpu_custom_call.1}
  #allocation0 [shape = 'u32[]', space=smem, size = 0x4, offset = 0x4, fixed_abs, tag = 'smem constant byte address 0x4 - core index']
  #allocation1 [shape = 'u32[144,128]{1,0:T(1,128)}', space=vmem, size = 0x12000, scoped, tag = 'internal scratch']
  %s0 = inlined_call_operand.hbm [shape: s32[3,128], index: 0, kind: input, shape index: {}]
  %s1 = inlined_call_operand.hbm [shape: bf16[3,128,128], index: 1, kind: input, shape index: {}]
  %s2 = inlined_call_operand.hbm [shape: f32[3,128,128], index: 2, kind: output, shape index: {}]
  %s3 = sld [smem:[#allocation0]]
  $region26: #{tpu_custom_call.1} parent=0
    _
  %s5 = ssub.s32 1, %s3
  %s6 = scalar_select 0, %s5, %s3
  $region1: #{tpu_custom_call.1} parent=0
    #allocation2 [shape = 'u8[2048]{0}', space=vmem, size = 0x800, scoped, tag = 'input window, operand 0, single buffered']
    #allocation3 [shape = 's32[1]{0}', space=sflag, size = 0x4, scoped, tag = 'scoped memory for tpu_custom_call.1']
    #allocation4 [shape = 's32[1]{0}', space=sflag, size = 0x4, scoped, tag = 'scoped memory for tpu_custom_call.1']
    #allocation5 [shape = 'u8[98304]{0}', space=vmem, size = 0x18000, scoped, tag = 'input window, operand 1, single buffered']
    #allocation6 [shape = 's32[1]{0}', space=sflag, size = 0x4, scoped, tag = 'scoped memory for tpu_custom_call.1']
    #allocation7 [shape = 'u8[196608]{0}', space=vmem, size = 0x30000, scoped, tag = 'output window, operand 0, single buffered']
    %7 = vsyncpa [#allocation3], 0
    %8 = vsyncpa [#allocation6], 0
    %9 = vsyncpa [#allocation4], 0
    // Predicated region
    $region2: #{tpu_custom_call.1} parent=1 // pred_check
      _
    $region3: #{tpu_custom_call.1} parent=1 // pred_check_branch
      %11 = sbr.rel (0) target = $region5
    $region4: #{tpu_custom_call.1} parent=1 // pred_region
      %s13 = ssub.s32 64, 64
      %14 = vsyncadd [#allocation3], %s13
      %s16 = sshll.u32 [#allocation2], 4
      %s17 = int_to_ptr.vmem [resolvable:$true] %s16
      %19 = dma.hbm_to_vmem [thread:$0]  %s0, 64, %s17, [#allocation3]
    $region5: #{tpu_custom_call.1} parent=1 // pred_fallthru
      _
    // Predicated region
    $region6: #{tpu_custom_call.1} parent=1 // pred_check
      _
    $region7: #{tpu_custom_call.1} parent=1 // pred_check_branch
      %21 = sbr.rel (0) target = $region9
    $region8: #{tpu_custom_call.1} parent=1 // pred_region
      %s23 = ssub.s32 3072, 3072
      %24 = vsyncadd [#allocation6], %s23
      %s25 = sshll.u32 [#allocation5], 4
      %s26 = int_to_ptr.vmem [resolvable:$true] %s25
      %31 = dma.hbm_to_vmem [thread:$0]  %s1, 3072, %s26, [#allocation6], 64, 64, 4
    $region9: #{tpu_custom_call.1} parent=1 // pred_fallthru
      _
    // Predicated region
    $region10: #{tpu_custom_call.1} parent=1 // pred_check
      _
    $region11: #{tpu_custom_call.1} parent=1 // pred_check_branch
      %33 = sbr.rel (0) target = $region13
    $region12: #{tpu_custom_call.1} parent=1 // pred_region
      %34 = dma.done [#allocation3], 64
    $region13: #{tpu_custom_call.1} parent=1 // pred_fallthru
      _
    // Predicated region
    $region14: #{tpu_custom_call.1} parent=1 // pred_check
      _
    $region15: #{tpu_custom_call.1} parent=1 // pred_check_branch
      %36 = sbr.rel (0) target = $region17
    $region16: #{tpu_custom_call.1} parent=1 // pred_region
      %37 = dma.done [#allocation6], 3072
    $region17: #{tpu_custom_call.1} parent=1 // pred_fallthru
      _
    %v39 = vld [vmem:[#allocation2] sm:$0x7]
    %v40 = vlaneseq
    %v41 = vand.u32 %v40, 127
    %v42 = vlaneseq
    %v43 = vshrl.u32 %v42, 7
    %v44 = vsub.s32 0, %v43
    %v45 = vrot.slane %v39, %v44
    %47 = vbcast.lane.b32.xlu0 %v45, 256
    %v48 = vpop.permute.xlu0 %47
    %s50 = sor.u32 256, 8
    %51 = vbcast.lane.b32.xlu0 %v45, %s50
    %v52 = vpop.permute.xlu0 %51
    %s54 = sor.u32 256, 16
    %55 = vbcast.lane.b32.xlu0 %v45, %s54
    %v56 = vpop.permute.xlu0 %55
    %s58 = sor.u32 256, 24
    %59 = vbcast.lane.b32.xlu0 %v45, %s58
    %v60 = vpop.permute.xlu0 %59
    %s62 = sor.u32 256, 32
    %63 = vbcast.lane.b32.xlu0 %v45, %s62
    %v64 = vpop.permute.xlu0 %63
    %s66 = sor.u32 256, 40
    %67 = vbcast.lane.b32.xlu0 %v45, %s66
    %v68 = vpop.permute.xlu0 %67
    %s70 = sor.u32 256, 48
    %71 = vbcast.lane.b32.xlu0 %v45, %s70
    %v72 = vpop.permute.xlu0 %71
    %s74 = sor.u32 256, 56
    %75 = vbcast.lane.b32.xlu0 %v45, %s74
    %v76 = vpop.permute.xlu0 %75
    %s78 = sor.u32 256, 64
    %79 = vbcast.lane.b32.xlu0 %v45, %s78
    %v80 = vpop.permute.xlu0 %79
    %s82 = sor.u32 256, 72
    %83 = vbcast.lane.b32.xlu0 %v45, %s82
    %v84 = vpop.permute.xlu0 %83
    %s86 = sor.u32 256, 80
    %87 = vbcast.lane.b32.xlu0 %v45, %s86
    %v88 = vpop.permute.xlu0 %87
    %s90 = sor.u32 256, 88
    %91 = vbcast.lane.b32.xlu0 %v45, %s90
    %v92 = vpop.permute.xlu0 %91
    %s94 = sor.u32 256, 96
    %95 = vbcast.lane.b32.xlu0 %v45, %s94
    %v96 = vpop.permute.xlu0 %95
    %s98 = sor.u32 256, 104
    %99 = vbcast.lane.b32.xlu0 %v45, %s98
    %v100 = vpop.permute.xlu0 %99
    %s102 = sor.u32 256, 112
    %103 = vbcast.lane.b32.xlu0 %v45, %s102
    %v104 = vpop.permute.xlu0 %103
    %s106 = sor.u32 256, 120
    %107 = vbcast.lane.b32.xlu0 %v45, %s106
    %v108 = vpop.permute.xlu0 %107
    %v109 = vlaneseq
    %v110 = vshrl.u32 %v109, 7
    %v111 = vsub.s32 1, %v110
    %v112 = vrot.slane %v39, %v111
    %114 = vbcast.lane.b32.xlu0 %v112, 256
    %v115 = vpop.permute.xlu0 %114
    %s117 = sor.u32 256, 8
    %118 = vbcast.lane.b32.xlu0 %v112, %s117
    %v119 = vpop.permute.xlu0 %118
    %s121 = sor.u32 256, 16
    %122 = vbcast.lane.b32.xlu0 %v112, %s121
    %v123 = vpop.permute.xlu0 %122
    %s125 = sor.u32 256, 24
    %126 = vbcast.lane.b32.xlu0 %v112, %s125
    %v127 = vpop.permute.xlu0 %126
    %s129 = sor.u32 256, 32
    %130 = vbcast.lane.b32.xlu0 %v112, %s129
    %v131 = vpop.permute.xlu0 %130
    %s133 = sor.u32 256, 40
    %134 = vbcast.lane.b32.xlu0 %v112, %s133
    %v135 = vpop.permute.xlu0 %134
    %s137 = sor.u32 256, 48
    %138 = vbcast.lane.b32.xlu0 %v112, %s137
    %v139 = vpop.permute.xlu0 %138
    %s141 = sor.u32 256, 56
    %142 = vbcast.lane.b32.xlu0 %v112, %s141
    %v143 = vpop.permute.xlu0 %142
    %s145 = sor.u32 256, 64
    %146 = vbcast.lane.b32.xlu0 %v112, %s145
    %v147 = vpop.permute.xlu0 %146
    %s149 = sor.u32 256, 72
    %150 = vbcast.lane.b32.xlu0 %v112, %s149
    %v151 = vpop.permute.xlu0 %150
    %s153 = sor.u32 256, 80
    %154 = vbcast.lane.b32.xlu0 %v112, %s153
    %v155 = vpop.permute.xlu0 %154
    %s157 = sor.u32 256, 88
    %158 = vbcast.lane.b32.xlu0 %v112, %s157
    %v159 = vpop.permute.xlu0 %158
    %s161 = sor.u32 256, 96
    %162 = vbcast.lane.b32.xlu0 %v112, %s161
    %v163 = vpop.permute.xlu0 %162
    %s165 = sor.u32 256, 104
    %166 = vbcast.lane.b32.xlu0 %v112, %s165
    %v167 = vpop.permute.xlu0 %166
    %s169 = sor.u32 256, 112
    %170 = vbcast.lane.b32.xlu0 %v112, %s169
    %v171 = vpop.permute.xlu0 %170
    %s173 = sor.u32 256, 120
    %174 = vbcast.lane.b32.xlu0 %v112, %s173
    %v175 = vpop.permute.xlu0 %174
    %v176 = vlaneseq
    %v177 = vshrl.u32 %v176, 7
    %v178 = vsub.s32 2, %v177
    %v179 = vrot.slane %v39, %v178
    %181 = vbcast.lane.b32.xlu0 %v179, 256
    %v182 = vpop.permute.xlu0 %181
    %s184 = sor.u32 256, 8
    %185 = vbcast.lane.b32.xlu0 %v179, %s184
    %v186 = vpop.permute.xlu0 %185
    %s188 = sor.u32 256, 16
    %189 = vbcast.lane.b32.xlu0 %v179, %s188
    %v190 = vpop.permute.xlu0 %189
    %s192 = sor.u32 256, 24
    %193 = vbcast.lane.b32.xlu0 %v179, %s192
    %v194 = vpop.permute.xlu0 %193
    %s196 = sor.u32 256, 32
    %197 = vbcast.lane.b32.xlu0 %v179, %s196
    %v198 = vpop.permute.xlu0 %197
    %s200 = sor.u32 256, 40
    %201 = vbcast.lane.b32.xlu0 %v179, %s200
    %v202 = vpop.permute.xlu0 %201
    %s204 = sor.u32 256, 48
    %205 = vbcast.lane.b32.xlu0 %v179, %s204
    %v206 = vpop.permute.xlu0 %205
    %s208 = sor.u32 256, 56
    %209 = vbcast.lane.b32.xlu0 %v179, %s208
    %v210 = vpop.permute.xlu0 %209
    %s212 = sor.u32 256, 64
    %213 = vbcast.lane.b32.xlu0 %v179, %s212
    %v214 = vpop.permute.xlu0 %213
    %s216 = sor.u32 256, 72
    %217 = vbcast.lane.b32.xlu0 %v179, %s216
    %v218 = vpop.permute.xlu0 %217
    %s220 = sor.u32 256, 80
    %221 = vbcast.lane.b32.xlu0 %v179, %s220
    %v222 = vpop.permute.xlu0 %221
    %s224 = sor.u32 256, 88
    %225 = vbcast.lane.b32.xlu0 %v179, %s224
    %v226 = vpop.permute.xlu0 %225
    %s228 = sor.u32 256, 96
    %229 = vbcast.lane.b32.xlu0 %v179, %s228
    %v230 = vpop.permute.xlu0 %229
    %s232 = sor.u32 256, 104
    %233 = vbcast.lane.b32.xlu0 %v179, %s232
    %v234 = vpop.permute.xlu0 %233
    %s236 = sor.u32 256, 112
    %237 = vbcast.lane.b32.xlu0 %v179, %s236
    %v238 = vpop.permute.xlu0 %237
    %s240 = sor.u32 256, 120
    %241 = vbcast.lane.b32.xlu0 %v179, %s240
    %v242 = vpop.permute.xlu0 %241
    %vm243 = vcmp.eq.s32.totalorder %v48, %v41
    %vm244 = vcmp.eq.s32.totalorder %v52, %v41
    %vm245 = vcmp.eq.s32.totalorder %v56, %v41
    %vm246 = vcmp.eq.s32.totalorder %v60, %v41
    %vm247 = vcmp.eq.s32.totalorder %v64, %v41
    %vm248 = vcmp.eq.s32.totalorder %v68, %v41
    %vm249 = vcmp.eq.s32.totalorder %v72, %v41
    %vm250 = vcmp.eq.s32.totalorder %v76, %v41
    %vm251 = vcmp.eq.s32.totalorder %v80, %v41
    %vm252 = vcmp.eq.s32.totalorder %v84, %v41
    %vm253 = vcmp.eq.s32.totalorder %v88, %v41
    %vm254 = vcmp.eq.s32.totalorder %v92, %v41
    %vm255 = vcmp.eq.s32.totalorder %v96, %v41
    %vm256 = vcmp.eq.s32.totalorder %v100, %v41
    %vm257 = vcmp.eq.s32.totalorder %v104, %v41
    %vm258 = vcmp.eq.s32.totalorder %v108, %v41
    %vm259 = vcmp.eq.s32.totalorder %v115, %v41
    %vm260 = vcmp.eq.s32.totalorder %v119, %v41
    %vm261 = vcmp.eq.s32.totalorder %v123, %v41
    %vm262 = vcmp.eq.s32.totalorder %v127, %v41
    %vm263 = vcmp.eq.s32.totalorder %v131, %v41
    %vm264 = vcmp.eq.s32.totalorder %v135, %v41
    %vm265 = vcmp.eq.s32.totalorder %v139, %v41
    %vm266 = vcmp.eq.s32.totalorder %v143, %v41
    %vm267 = vcmp.eq.s32.totalorder %v147, %v41
    %vm268 = vcmp.eq.s32.totalorder %v151, %v41
    %vm269 = vcmp.eq.s32.totalorder %v155, %v41
    %vm270 = vcmp.eq.s32.totalorder %v159, %v41
    %vm271 = vcmp.eq.s32.totalorder %v163, %v41
    %vm272 = vcmp.eq.s32.totalorder %v167, %v41
    %vm273 = vcmp.eq.s32.totalorder %v171, %v41
    %vm274 = vcmp.eq.s32.totalorder %v175, %v41
    %vm275 = vcmp.eq.s32.totalorder %v182, %v41
    %vm276 = vcmp.eq.s32.totalorder %v186, %v41
    %vm277 = vcmp.eq.s32.totalorder %v190, %v41
    %vm278 = vcmp.eq.s32.totalorder %v194, %v41
    %vm279 = vcmp.eq.s32.totalorder %v198, %v41
    %vm280 = vcmp.eq.s32.totalorder %v202, %v41
    %vm281 = vcmp.eq.s32.totalorder %v206, %v41
    %vm282 = vcmp.eq.s32.totalorder %v210, %v41
    %vm283 = vcmp.eq.s32.totalorder %v214, %v41
    %vm284 = vcmp.eq.s32.totalorder %v218, %v41
    %vm285 = vcmp.eq.s32.totalorder %v222, %v41
    %vm286 = vcmp.eq.s32.totalorder %v226, %v41
    %vm287 = vcmp.eq.s32.totalorder %v230, %v41
    %vm288 = vcmp.eq.s32.totalorder %v234, %v41
    %vm289 = vcmp.eq.s32.totalorder %v238, %v41
    %vm290 = vcmp.eq.s32.totalorder %v242, %v41
    %v291 = vsel %vm243, 1, 0
    %v292 = vsel %vm244, 1, 0
    %v293 = vsel %vm245, 1, 0
    %v294 = vsel %vm246, 1, 0
    %v295 = vsel %vm247, 1, 0
    %v296 = vsel %vm248, 1, 0
    %v297 = vsel %vm249, 1, 0
    %v298 = vsel %vm250, 1, 0
    %v299 = vsel %vm251, 1, 0
    %v300 = vsel %vm252, 1, 0
    %v301 = vsel %vm253, 1, 0
    %v302 = vsel %vm254, 1, 0
    %v303 = vsel %vm255, 1, 0
    %v304 = vsel %vm256, 1, 0
    %v305 = vsel %vm257, 1, 0
    %v306 = vsel %vm258, 1, 0
    %v307 = vsel %vm259, 1, 0
    %v308 = vsel %vm260, 1, 0
    %v309 = vsel %vm261, 1, 0
    %v310 = vsel %vm262, 1, 0
    %v311 = vsel %vm263, 1, 0
    %v312 = vsel %vm264, 1, 0
    %v313 = vsel %vm265, 1, 0
    %v314 = vsel %vm266, 1, 0
    %v315 = vsel %vm267, 1, 0
    %v316 = vsel %vm268, 1, 0
    %v317 = vsel %vm269, 1, 0
    %v318 = vsel %vm270, 1, 0
    %v319 = vsel %vm271, 1, 0
    %v320 = vsel %vm272, 1, 0
    %v321 = vsel %vm273, 1, 0
    %v322 = vsel %vm274, 1, 0
    %v323 = vsel %vm275, 1, 0
    %v324 = vsel %vm276, 1, 0
    %v325 = vsel %vm277, 1, 0
    %v326 = vsel %vm278, 1, 0
    %v327 = vsel %vm279, 1, 0
    %v328 = vsel %vm280, 1, 0
    %v329 = vsel %vm281, 1, 0
    %v330 = vsel %vm282, 1, 0
    %v331 = vsel %vm283, 1, 0
    %v332 = vsel %vm284, 1, 0
    %v333 = vsel %vm285, 1, 0
    %v334 = vsel %vm286, 1, 0
    %v335 = vsel %vm287, 1, 0
    %v336 = vsel %vm288, 1, 0
    %v337 = vsel %vm289, 1, 0
    %v338 = vsel %vm290, 1, 0
    %v339 = vcvt.s32.f32 %v291
    %v340 = vcvt.s32.f32 %v292
    %v341 = vcvt.s32.f32 %v293
    %v342 = vcvt.s32.f32 %v294
    %v343 = vcvt.s32.f32 %v295
    %v344 = vcvt.s32.f32 %v296
    %v345 = vcvt.s32.f32 %v297
    %v346 = vcvt.s32.f32 %v298
    %v347 = vcvt.s32.f32 %v299
    %v348 = vcvt.s32.f32 %v300
    %v349 = vcvt.s32.f32 %v301
    %v350 = vcvt.s32.f32 %v302
    %v351 = vcvt.s32.f32 %v303
    %v352 = vcvt.s32.f32 %v304
    %v353 = vcvt.s32.f32 %v305
    %v354 = vcvt.s32.f32 %v306
    %v355 = vcvt.s32.f32 %v307
    %v356 = vcvt.s32.f32 %v308
    %v357 = vcvt.s32.f32 %v309
    %v358 = vcvt.s32.f32 %v310
    %v359 = vcvt.s32.f32 %v311
    %v360 = vcvt.s32.f32 %v312
    %v361 = vcvt.s32.f32 %v313
    %v362 = vcvt.s32.f32 %v314
    %v363 = vcvt.s32.f32 %v315
    %v364 = vcvt.s32.f32 %v316
    %v365 = vcvt.s32.f32 %v317
    %v366 = vcvt.s32.f32 %v318
    %v367 = vcvt.s32.f32 %v319
    %v368 = vcvt.s32.f32 %v320
    %v369 = vcvt.s32.f32 %v321
    %v370 = vcvt.s32.f32 %v322
    %v371 = vcvt.s32.f32 %v323
    %v372 = vcvt.s32.f32 %v324
    %v373 = vcvt.s32.f32 %v325
    %v374 = vcvt.s32.f32 %v326
    %v375 = vcvt.s32.f32 %v327
    %v376 = vcvt.s32.f32 %v328
    %v377 = vcvt.s32.f32 %v329
    %v378 = vcvt.s32.f32 %v330
    %v379 = vcvt.s32.f32 %v331
    %v380 = vcvt.s32.f32 %v332
    %v381 = vcvt.s32.f32 %v333
    %v382 = vcvt.s32.f32 %v334
    %v383 = vcvt.s32.f32 %v335
    %v384 = vcvt.s32.f32 %v336
    %v385 = vcvt.s32.f32 %v337
    %v386 = vcvt.s32.f32 %v338
    %v387 = vpack.c.bf16 %v340, %v339
    %v388 = vpack.c.bf16 %v342, %v341
    %v389 = vpack.c.bf16 %v344, %v343
    %v390 = vpack.c.bf16 %v346, %v345
    %v391 = vpack.c.bf16 %v348, %v347
    %v392 = vpack.c.bf16 %v350, %v349
    %v393 = vpack.c.bf16 %v352, %v351
    %v394 = vpack.c.bf16 %v354, %v353
    %v395 = vpack.c.bf16 %v356, %v355
    %v396 = vpack.c.bf16 %v358, %v357
    %v397 = vpack.c.bf16 %v360, %v359
    %v398 = vpack.c.bf16 %v362, %v361
    %v399 = vpack.c.bf16 %v364, %v363
    %v400 = vpack.c.bf16 %v366, %v365
    %v401 = vpack.c.bf16 %v368, %v367
    %v402 = vpack.c.bf16 %v370, %v369
    %v403 = vpack.c.bf16 %v372, %v371
    %v404 = vpack.c.bf16 %v374, %v373
    %v405 = vpack.c.bf16 %v376, %v375
    %v406 = vpack.c.bf16 %v378, %v377
    %v407 = vpack.c.bf16 %v380, %v379
    %v408 = vpack.c.bf16 %v382, %v381
    %v409 = vpack.c.bf16 %v384, %v383
    %v410 = vpack.c.bf16 %v386, %v385
    %v411 = vld [vmem:[#allocation5] sm:$0xf]
    %v412 = vld [vmem:[#allocation5 + $0x4] sm:$0xf]
    %v413 = vld [vmem:[#allocation5 + $0x8] sm:$0xf]
    %v414 = vld [vmem:[#allocation5 + $0xc] sm:$0xf]
    %v415 = vld [vmem:[#allocation5 + $0x10] sm:$0xf]
    %v416 = vld [vmem:[#allocation5 + $0x14] sm:$0xf]
    %v417 = vld [vmem:[#allocation5 + $0x18] sm:$0xf]
    %v418 = vld [vmem:[#allocation5 + $0x1c] sm:$0xf]
    %v419 = vld [vmem:[#allocation5 + $0x20] sm:$0xf]
    %v420 = vld [vmem:[#allocation5 + $0x24] sm:$0xf]
    %v421 = vld [vmem:[#allocation5 + $0x28] sm:$0xf]
    %v422 = vld [vmem:[#allocation5 + $0x2c] sm:$0xf]
    %v423 = vld [vmem:[#allocation5 + $0x30] sm:$0xf]
    %v424 = vld [vmem:[#allocation5 + $0x34] sm:$0xf]
    %v425 = vld [vmem:[#allocation5 + $0x38] sm:$0xf]
    %v426 = vld [vmem:[#allocation5 + $0x3c] sm:$0xf]
    %v427 = vld [vmem:[#allocation5 + $0x40] sm:$0xf]
    %v428 = vld [vmem:[#allocation5 + $0x44] sm:$0xf]
    %v429 = vld [vmem:[#allocation5 + $0x48] sm:$0xf]
    %v430 = vld [vmem:[#allocation5 + $0x4c] sm:$0xf]
    %v431 = vld [vmem:[#allocation5 + $0x50] sm:$0xf]
    %v432 = vld [vmem:[#allocation5 + $0x54] sm:$0xf]
    %v433 = vld [vmem:[#allocation5 + $0x58] sm:$0xf]
    %v434 = vld [vmem:[#allocation5 + $0x5c] sm:$0xf]
    %v435 = vld [vmem:[#allocation5 + $0x60] sm:$0xf]
    %v436 = vld [vmem:[#allocation5 + $0x64] sm:$0xf]
    %v437 = vld [vmem:[#allocation5 + $0x68] sm:$0xf]
    %v438 = vld [vmem:[#allocation5 + $0x6c] sm:$0xf]
    %v439 = vld [vmem:[#allocation5 + $0x70] sm:$0xf]
    %v440 = vld [vmem:[#allocation5 + $0x74] sm:$0xf]
    %v441 = vld [vmem:[#allocation5 + $0x78] sm:$0xf]
    %v442 = vld [vmem:[#allocation5 + $0x7c] sm:$0xf]
    %v443 = vld [vmem:[#allocation5 + $0x80] sm:$0xf]
    %v444 = vld [vmem:[#allocation5 + $0x84] sm:$0xf]
    %v445 = vld [vmem:[#allocation5 + $0x88] sm:$0xf]
    %v446 = vld [vmem:[#allocation5 + $0x8c] sm:$0xf]
    %v447 = vld [vmem:[#allocation5 + $0x90] sm:$0xf]
    %v448 = vld [vmem:[#allocation5 + $0x94] sm:$0xf]
    %v449 = vld [vmem:[#allocation5 + $0x98] sm:$0xf]
    %v450 = vld [vmem:[#allocation5 + $0x9c] sm:$0xf]
    %v451 = vld [vmem:[#allocation5 + $0xa0] sm:$0xf]
    %v452 = vld [vmem:[#allocation5 + $0xa4] sm:$0xf]
    %v453 = vld [vmem:[#allocation5 + $0xa8] sm:$0xf]
    %v454 = vld [vmem:[#allocation5 + $0xac] sm:$0xf]
    %v455 = vld [vmem:[#allocation5 + $0xb0] sm:$0xf]
    %v456 = vld [vmem:[#allocation5 + $0xb4] sm:$0xf]
    %v457 = vld [vmem:[#allocation5 + $0xb8] sm:$0xf]
    %v458 = vld [vmem:[#allocation5 + $0xbc] sm:$0xf]
    %v475 = vunpack.c.l.b16 %v411
    %v476 = vunpack.c.l.b16 %v412
    %v477 = vunpack.c.l.b16 %v413
    %v478 = vunpack.c.l.b16 %v414
    %v479 = vunpack.c.l.b16 %v415
    %v480 = vunpack.c.l.b16 %v416
    %v481 = vunpack.c.l.b16 %v417
    %v482 = vunpack.c.l.b16 %v418
    %v483 = vunpack.c.l.b16 %v419
    %v484 = vunpack.c.l.b16 %v420
    %v485 = vunpack.c.l.b16 %v421
    %v486 = vunpack.c.l.b16 %v422
    %v487 = vunpack.c.l.b16 %v423
    %v488 = vunpack.c.l.b16 %v424
    %v489 = vunpack.c.l.b16 %v425
    %v490 = vunpack.c.l.b16 %v426
    %v491 = vpack.c.b16 %v476, %v475
    %v492 = vpack.c.b16 %v478, %v477
    %v493 = vpack.c.b16 %v480, %v479
    %v494 = vpack.c.b16 %v482, %v481
    %v495 = vpack.c.b16 %v484, %v483
    %v496 = vpack.c.b16 %v486, %v485
    %v497 = vpack.c.b16 %v488, %v487
    %v498 = vpack.c.b16 %v490, %v489
    %507 = vmatprep.subr.bf16.mxu0 0
    %508 = vmatpush1.bf16.msra.mxu0 %v491
    %509 = vmatprep.subr.bf16.mxu0 0
    %510 = vmatpush1.bf16.msra.mxu0 %v492
    %511 = vmatprep.subr.bf16.mxu0 0
    %512 = vmatpush1.bf16.msra.mxu0 %v493
    %513 = vmatprep.subr.bf16.mxu0 0
    %514 = vmatpush1.bf16.msra.mxu0 %v494
    %515 = vmatprep.subr.bf16.mxu0 0
    %516 = vmatpush1.bf16.msra.mxu0 %v495
    %517 = vmatprep.subr.bf16.mxu0 0
    %518 = vmatpush1.bf16.msra.mxu0 %v496
    %519 = vmatprep.subr.bf16.mxu0 0
    %520 = vmatpush1.bf16.msra.mxu0 %v497
    %521 = vmatprep.subr.bf16.mxu0 0
    %522 = vmatpush1.bf16.msra.mxu0 %v498
    %523 = vmatprep.subr.bf16.mxu0 0
    %524 = vmatpush1.bf16.msra.mxu0 0
    %525 = vmatprep.subr.bf16.mxu0 0
    %526 = vmatpush1.bf16.msra.mxu0 0
    %527 = vmatprep.subr.bf16.mxu0 0
    %528 = vmatpush1.bf16.msra.mxu0 0
    %529 = vmatprep.subr.bf16.mxu0 0
    %530 = vmatpush1.bf16.msra.mxu0 0
    %531 = vmatprep.subr.bf16.mxu0 0
    %532 = vmatpush1.bf16.msra.mxu0 0
    %533 = vmatprep.subr.bf16.mxu0 0
    %534 = vmatpush1.bf16.msra.mxu0 0
    %535 = vmatprep.subr.bf16.mxu0 0
    %536 = vmatpush1.bf16.msra.mxu0 0
    %537 = vmatprep.subr.bf16.mxu0 0
    %538 = vmatpush1.bf16.msra.mxu0 0
    %539 = vmatprep.mubr.bf16.mxu0 0
    %540 = vmatmul.mubr.bf16.gmra.mrb[0].mxu0 %v387
    %v541 = vpop.f32.mrb[0].mxu0
    %v542 = vadd.f32 0.0, %v541
    %v543 = vpop.f32.mrb[0].mxu0
    %v544 = vpop.f32.mrb[0].mxu0
    %v545 = vadd.f32 0.0, %v544
    %v546 = vpop.f32.mrb[0].mxu0
    %547 = vmatprep.mubr.bf16.mxu0 0
    %548 = vmatmul.mubr.bf16.gmra.mrb[0].mxu0 %v388
    %v549 = vpop.f32.mrb[0].mxu0
    %v550 = vadd.f32 0.0, %v549
    %v551 = vpop.f32.mrb[0].mxu0
    %v552 = vpop.f32.mrb[0].mxu0
    %v553 = vadd.f32 0.0, %v552
    %v554 = vpop.f32.mrb[0].mxu0
    %555 = vmatprep.mubr.bf16.mxu0 0
    %556 = vmatmul.mubr.bf16.gmra.mrb[0].mxu0 %v389
    %v557 = vpop.f32.mrb[0].mxu0
    %v558 = vadd.f32 0.0, %v557
    %v559 = vpop.f32.mrb[0].mxu0
    %v560 = vpop.f32.mrb[0].mxu0
    %v561 = vadd.f32 0.0, %v560
    %v562 = vpop.f32.mrb[0].mxu0
    %563 = vmatprep.mubr.bf16.mxu0 0
    %564 = vmatmul.mubr.bf16.gmra.mrb[0].mxu0 %v390
    %v565 = vpop.f32.mrb[0].mxu0
    %v566 = vadd.f32 0.0, %v565
    %v567 = vpop.f32.mrb[0].mxu0
    %v568 = vpop.f32.mrb[0].mxu0
    %v569 = vadd.f32 0.0, %v568
    %v570 = vpop.f32.mrb[0].mxu0
    %571 = vmatprep.mubr.bf16.mxu0 0
    %572 = vmatmul.mubr.bf16.gmra.mrb[0].mxu0 %v391
    %v573 = vpop.f32.mrb[0].mxu0
    %v574 = vadd.f32 0.0, %v573
    %v575 = vpop.f32.mrb[0].mxu0
    %v576 = vpop.f32.mrb[0].mxu0
    %v577 = vadd.f32 0.0, %v576
    %v578 = vpop.f32.mrb[0].mxu0
    %579 = vmatprep.mubr.bf16.mxu0 0
    %580 = vmatmul.mubr.bf16.gmra.mrb[0].mxu0 %v392
    %v581 = vpop.f32.mrb[0].mxu0
    %v582 = vadd.f32 0.0, %v581
    %v583 = vpop.f32.mrb[0].mxu0
    %v584 = vpop.f32.mrb[0].mxu0
    %v585 = vadd.f32 0.0, %v584
    %v586 = vpop.f32.mrb[0].mxu0
    %587 = vmatprep.mubr.bf16.mxu0 0
    %588 = vmatmul.mubr.bf16.gmra.mrb[0].mxu0 %v393
    %v589 = vpop.f32.mrb[0].mxu0
    %v590 = vadd.f32 0.0, %v589
    %v591 = vpop.f32.mrb[0].mxu0
    %v592 = vpop.f32.mrb[0].mxu0
    %v593 = vadd.f32 0.0, %v592
    %v594 = vpop.f32.mrb[0].mxu0
    %595 = vmatprep.mubr.bf16.mxu0 0
    %596 = vmatmul.mubr.bf16.gmra.mrb[0].mxu0 %v394
    %v597 = vpop.f32.mrb[0].mxu0
    %v598 = vadd.f32 0.0, %v597
    %v599 = vpop.f32.mrb[0].mxu0
    %v600 = vpop.f32.mrb[0].mxu0
    %v601 = vadd.f32 0.0, %v600
    %v602 = vpop.f32.mrb[0].mxu0
    %603 = vdwg.mxu0
    %v620 = vunpack.c.l.b16 %v427
    %v621 = vunpack.c.l.b16 %v428
    %v622 = vunpack.c.l.b16 %v429
    %v623 = vunpack.c.l.b16 %v430
    %v624 = vunpack.c.l.b16 %v431
    %v625 = vunpack.c.l.b16 %v432
    %v626 = vunpack.c.l.b16 %v433
    %v627 = vunpack.c.l.b16 %v434
    %v628 = vunpack.c.l.b16 %v435
    %v629 = vunpack.c.l.b16 %v436
    %v630 = vunpack.c.l.b16 %v437
    %v631 = vunpack.c.l.b16 %v438
    %v632 = vunpack.c.l.b16 %v439
    %v633 = vunpack.c.l.b16 %v440
    %v634 = vunpack.c.l.b16 %v441
    %v635 = vunpack.c.l.b16 %v442
    %v636 = vpack.c.b16 %v621, %v620
    %v637 = vpack.c.b16 %v623, %v622
    %v638 = vpack.c.b16 %v625, %v624
    %v639 = vpack.c.b16 %v627, %v626
    %v640 = vpack.c.b16 %v629, %v628
    %v641 = vpack.c.b16 %v631, %v630
    %v642 = vpack.c.b16 %v633, %v632
    %v643 = vpack.c.b16 %v635, %v634
    %652 = vmatprep.subr.bf16.mxu0 0
    %653 = vmatpush1.bf16.msra.mxu0 %v636
    %654 = vmatprep.subr.bf16.mxu0 0
    %655 = vmatpush1.bf16.msra.mxu0 %v637
    %656 = vmatprep.subr.bf16.mxu0 0
    %657 = vmatpush1.bf16.msra.mxu0 %v638
    %658 = vmatprep.subr.bf16.mxu0 0
    %659 = vmatpush1.bf16.msra.mxu0 %v639
    %660 = vmatprep.subr.bf16.mxu0 0
    %661 = vmatpush1.bf16.msra.mxu0 %v640
    %662 = vmatprep.subr.bf16.mxu0 0
    %663 = vmatpush1.bf16.msra.mxu0 %v641
    %664 = vmatprep.subr.bf16.mxu0 0
    %665 = vmatpush1.bf16.msra.mxu0 %v642
    %666 = vmatprep.subr.bf16.mxu0 0
    %667 = vmatpush1.bf16.msra.mxu0 %v643
    %668 = vmatprep.subr.bf16.mxu0 0
    %669 = vmatpush1.bf16.msra.mxu0 0
    %670 = vmatprep.subr.bf16.mxu0 0
    %671 = vmatpush1.bf16.msra.mxu0 0
    %672 = vmatprep.subr.bf16.mxu0 0
    %673 = vmatpush1.bf16.msra.mxu0 0
    %674 = vmatprep.subr.bf16.mxu0 0
    %675 = vmatpush1.bf16.msra.mxu0 0
    %676 = vmatprep.subr.bf16.mxu0 0
    %677 = vmatpush1.bf16.msra.mxu0 0
    %678 = vmatprep.subr.bf16.mxu0 0
    %679 = vmatpush1.bf16.msra.mxu0 0
    %680 = vmatprep.subr.bf16.mxu0 0
    %681 = vmatpush1.bf16.msra.mxu0 0
    %682 = vmatprep.subr.bf16.mxu0 0
    %683 = vmatpush1.bf16.msra.mxu0 0
    %684 = vmatprep.mubr.bf16.mxu0 0
    %685 = vmatmul.mubr.bf16.gmra.mrb[0].mxu0 %v395
    %v686 = vpop.f32.mrb[0].mxu0
    %v687 = vadd.f32 0.0, %v686
    %v688 = vpop.f32.mrb[0].mxu0
    %v689 = vpop.f32.mrb[0].mxu0
    %v690 = vadd.f32 0.0, %v689
    %v691 = vpop.f32.mrb[0].mxu0
    %692 = vmatprep.mubr.bf16.mxu0 0
    %693 = vmatmul.mubr.bf16.gmra.mrb[0].mxu0 %v396
    %v694 = vpop.f32.mrb[0].mxu0
    %v695 = vadd.f32 0.0, %v694
    %v696 = vpop.f32.mrb[0].mxu0
    %v697 = vpop.f32.mrb[0].mxu0
    %v698 = vadd.f32 0.0, %v697
    %v699 = vpop.f32.mrb[0].mxu0
    %700 = vmatprep.mubr.bf16.mxu0 0
    %701 = vmatmul.mubr.bf16.gmra.mrb[0].mxu0 %v397
    %v702 = vpop.f32.mrb[0].mxu0
    %v703 = vadd.f32 0.0, %v702
    %v704 = vpop.f32.mrb[0].mxu0
    %v705 = vpop.f32.mrb[0].mxu0
    %v706 = vadd.f32 0.0, %v705
    %v707 = vpop.f32.mrb[0].mxu0
    %708 = vmatprep.mubr.bf16.mxu0 0
    %709 = vmatmul.mubr.bf16.gmra.mrb[0].mxu0 %v398
    %v710 = vpop.f32.mrb[0].mxu0
    %v711 = vadd.f32 0.0, %v710
    %v712 = vpop.f32.mrb[0].mxu0
    %v713 = vpop.f32.mrb[0].mxu0
    %v714 = vadd.f32 0.0, %v713
    %v715 = vpop.f32.mrb[0].mxu0
    %716 = vmatprep.mubr.bf16.mxu0 0
    %717 = vmatmul.mubr.bf16.gmra.mrb[0].mxu0 %v399
    %v718 = vpop.f32.mrb[0].mxu0
    %v719 = vadd.f32 0.0, %v718
    %v720 = vpop.f32.mrb[0].mxu0
    %v721 = vpop.f32.mrb[0].mxu0
    %v722 = vadd.f32 0.0, %v721
    %v723 = vpop.f32.mrb[0].mxu0
    %724 = vmatprep.mubr.bf16.mxu0 0
    %725 = vmatmul.mubr.bf16.gmra.mrb[0].mxu0 %v400
    %v726 = vpop.f32.mrb[0].mxu0
    %v727 = vadd.f32 0.0, %v726
    %v728 = vpop.f32.mrb[0].mxu0
    %v729 = vpop.f32.mrb[0].mxu0
    %v730 = vadd.f32 0.0, %v729
    %v731 = vpop.f32.mrb[0].mxu0
    %732 = vmatprep.mubr.bf16.mxu0 0
    %733 = vmatmul.mubr.bf16.gmra.mrb[0].mxu0 %v401
    %v734 = vpop.f32.mrb[0].mxu0
    %v735 = vadd.f32 0.0, %v734
    %v736 = vpop.f32.mrb[0].mxu0
    %v737 = vpop.f32.mrb[0].mxu0
    %v738 = vadd.f32 0.0, %v737
    %v739 = vpop.f32.mrb[0].mxu0
    %740 = vmatprep.mubr.bf16.mxu0 0
    %741 = vmatmul.mubr.bf16.gmra.mrb[0].mxu0 %v402
    %v742 = vpop.f32.mrb[0].mxu0
    %v743 = vadd.f32 0.0, %v742
    %v744 = vpop.f32.mrb[0].mxu0
    %v745 = vpop.f32.mrb[0].mxu0
    %v746 = vadd.f32 0.0, %v745
    %v747 = vpop.f32.mrb[0].mxu0
    %748 = vdwg.mxu0
    %v765 = vunpack.c.l.b16 %v443
    %v766 = vunpack.c.l.b16 %v444
    %v767 = vunpack.c.l.b16 %v445
    %v768 = vunpack.c.l.b16 %v446
    %v769 = vunpack.c.l.b16 %v447
    %v770 = vunpack.c.l.b16 %v448
    %v771 = vunpack.c.l.b16 %v449
    %v772 = vunpack.c.l.b16 %v450
    %v773 = vunpack.c.l.b16 %v451
    %v774 = vunpack.c.l.b16 %v452
    %v775 = vunpack.c.l.b16 %v453
    %v776 = vunpack.c.l.b16 %v454
    %v777 = vunpack.c.l.b16 %v455
    %v778 = vunpack.c.l.b16 %v456
    %v779 = vunpack.c.l.b16 %v457
    %v780 = vunpack.c.l.b16 %v458
    %v781 = vpack.c.b16 %v766, %v765
    %v782 = vpack.c.b16 %v768, %v767
    %v783 = vpack.c.b16 %v770, %v769
    %v784 = vpack.c.b16 %v772, %v771
    %v785 = vpack.c.b16 %v774, %v773
    %v786 = vpack.c.b16 %v776, %v775
    %v787 = vpack.c.b16 %v778, %v777
    %v788 = vpack.c.b16 %v780, %v779
    %797 = vmatprep.subr.bf16.mxu0 0
    %798 = vmatpush1.bf16.msra.mxu0 %v781
    %799 = vmatprep.subr.bf16.mxu0 0
    %800 = vmatpush1.bf16.msra.mxu0 %v782
    %801 = vmatprep.subr.bf16.mxu0 0
    %802 = vmatpush1.bf16.msra.mxu0 %v783
    %803 = vmatprep.subr.bf16.mxu0 0
    %804 = vmatpush1.bf16.msra.mxu0 %v784
    %805 = vmatprep.subr.bf16.mxu0 0
    %806 = vmatpush1.bf16.msra.mxu0 %v785
    %807 = vmatprep.subr.bf16.mxu0 0
    %808 = vmatpush1.bf16.msra.mxu0 %v786
    %809 = vmatprep.subr.bf16.mxu0 0
    %810 = vmatpush1.bf16.msra.mxu0 %v787
    %811 = vmatprep.subr.bf16.mxu0 0
    %812 = vmatpush1.bf16.msra.mxu0 %v788
    %813 = vmatprep.subr.bf16.mxu0 0
    %814 = vmatpush1.bf16.msra.mxu0 0
    %815 = vmatprep.subr.bf16.mxu0 0
    %816 = vmatpush1.bf16.msra.mxu0 0
    %817 = vmatprep.subr.bf16.mxu0 0
    %818 = vmatpush1.bf16.msra.mxu0 0
    %819 = vmatprep.subr.bf16.mxu0 0
    %820 = vmatpush1.bf16.msra.mxu0 0
    %821 = vmatprep.subr.bf16.mxu0 0
    %822 = vmatpush1.bf16.msra.mxu0 0
    %823 = vmatprep.subr.bf16.mxu0 0
    %824 = vmatpush1.bf16.msra.mxu0 0
    %825 = vmatprep.subr.bf16.mxu0 0
    %826 = vmatpush1.bf16.msra.mxu0 0
    %827 = vmatprep.subr.bf16.mxu0 0
    %828 = vmatpush1.bf16.msra.mxu0 0
    %829 = vmatprep.mubr.bf16.mxu0 0
    %830 = vmatmul.mubr.bf16.gmra.mrb[0].mxu0 %v403
    %v831 = vpop.f32.mrb[0].mxu0
    %v832 = vadd.f32 0.0, %v831
    %v833 = vpop.f32.mrb[0].mxu0
    %v834 = vpop.f32.mrb[0].mxu0
    %v835 = vadd.f32 0.0, %v834
    %v836 = vpop.f32.mrb[0].mxu0
    %837 = vmatprep.mubr.bf16.mxu0 0
    %838 = vmatmul.mubr.bf16.gmra.mrb[0].mxu0 %v404
    %v839 = vpop.f32.mrb[0].mxu0
    %v840 = vadd.f32 0.0, %v839
    %v841 = vpop.f32.mrb[0].mxu0
    %v842 = vpop.f32.mrb[0].mxu0
    %v843 = vadd.f32 0.0, %v842
    %v844 = vpop.f32.mrb[0].mxu0
    %845 = vmatprep.mubr.bf16.mxu0 0
    %846 = vmatmul.mubr.bf16.gmra.mrb[0].mxu0 %v405
    %v847 = vpop.f32.mrb[0].mxu0
    %v848 = vadd.f32 0.0, %v847
    %v849 = vpop.f32.mrb[0].mxu0
    %v850 = vpop.f32.mrb[0].mxu0
    %v851 = vadd.f32 0.0, %v850
    %v852 = vpop.f32.mrb[0].mxu0
    %853 = vmatprep.mubr.bf16.mxu0 0
    %854 = vmatmul.mubr.bf16.gmra.mrb[0].mxu0 %v406
    %v855 = vpop.f32.mrb[0].mxu0
    %v856 = vadd.f32 0.0, %v855
    %v857 = vpop.f32.mrb[0].mxu0
    %v858 = vpop.f32.mrb[0].mxu0
    %v859 = vadd.f32 0.0, %v858
    %v860 = vpop.f32.mrb[0].mxu0
    %861 = vmatprep.mubr.bf16.mxu0 0
    %862 = vmatmul.mubr.bf16.gmra.mrb[0].mxu0 %v407
    %v863 = vpop.f32.mrb[0].mxu0
    %v864 = vadd.f32 0.0, %v863
    %v865 = vpop.f32.mrb[0].mxu0
    %v866 = vpop.f32.mrb[0].mxu0
    %v867 = vadd.f32 0.0, %v866
    %v868 = vpop.f32.mrb[0].mxu0
    %869 = vmatprep.mubr.bf16.mxu0 0
    %870 = vmatmul.mubr.bf16.gmra.mrb[0].mxu0 %v408
    %v871 = vpop.f32.mrb[0].mxu0
    %v872 = vadd.f32 0.0, %v871
    %v873 = vpop.f32.mrb[0].mxu0
    %v874 = vpop.f32.mrb[0].mxu0
    %v875 = vadd.f32 0.0, %v874
    %v876 = vpop.f32.mrb[0].mxu0
    %877 = vmatprep.mubr.bf16.mxu0 0
    %878 = vmatmul.mubr.bf16.gmra.mrb[0].mxu0 %v409
    %v879 = vpop.f32.mrb[0].mxu0
    %v880 = vadd.f32 0.0, %v879
    %v881 = vpop.f32.mrb[0].mxu0
    %v882 = vpop.f32.mrb[0].mxu0
    %v883 = vadd.f32 0.0, %v882
    %v884 = vpop.f32.mrb[0].mxu0
    %885 = vmatprep.mubr.bf16.mxu0 0
    %886 = vmatmul.mubr.bf16.gmra.mrb[0].mxu0 %v410
    %v887 = vpop.f32.mrb[0].mxu0
    %v888 = vadd.f32 0.0, %v887
    %v889 = vpop.f32.mrb[0].mxu0
    %v890 = vpop.f32.mrb[0].mxu0
    %v891 = vadd.f32 0.0, %v890
    %v892 = vpop.f32.mrb[0].mxu0
    %893 = vdwg.mxu0
    %894 = vst [vmem:[#allocation7] sm:$0xff] %v542
    %895 = vst [vmem:[#allocation7 + $0x8] sm:$0xff] %v545
    %896 = vst [vmem:[#allocation7 + $0x10] sm:$0xff] %v550
    %897 = vst [vmem:[#allocation7 + $0x18] sm:$0xff] %v553
    %898 = vst [vmem:[#allocation7 + $0x20] sm:$0xff] %v558
    %899 = vst [vmem:[#allocation7 + $0x28] sm:$0xff] %v561
    %900 = vst [vmem:[#allocation7 + $0x30] sm:$0xff] %v566
    %901 = vst [vmem:[#allocation7 + $0x38] sm:$0xff] %v569
    %902 = vst [vmem:[#allocation7 + $0x40] sm:$0xff] %v574
    %903 = vst [vmem:[#allocation7 + $0x48] sm:$0xff] %v577
    %904 = vst [vmem:[#allocation7 + $0x50] sm:$0xff] %v582
    %905 = vst [vmem:[#allocation7 + $0x58] sm:$0xff] %v585
    %906 = vst [vmem:[#allocation7 + $0x60] sm:$0xff] %v590
    %907 = vst [vmem:[#allocation7 + $0x68] sm:$0xff] %v593
    %908 = vst [vmem:[#allocation7 + $0x70] sm:$0xff] %v598
    %909 = vst [vmem:[#allocation7 + $0x78] sm:$0xff] %v601
    %910 = vst [vmem:[#allocation7 + $0x80] sm:$0xff] %v687
    %911 = vst [vmem:[#allocation7 + $0x88] sm:$0xff] %v690
    %912 = vst [vmem:[#allocation7 + $0x90] sm:$0xff] %v695
    %913 = vst [vmem:[#allocation7 + $0x98] sm:$0xff] %v698
    %914 = vst [vmem:[#allocation7 + $0xa0] sm:$0xff] %v703
    %915 = vst [vmem:[#allocation7 + $0xa8] sm:$0xff] %v706
    %916 = vst [vmem:[#allocation7 + $0xb0] sm:$0xff] %v711
    %917 = vst [vmem:[#allocation7 + $0xb8] sm:$0xff] %v714
    %918 = vst [vmem:[#allocation7 + $0xc0] sm:$0xff] %v719
    %919 = vst [vmem:[#allocation7 + $0xc8] sm:$0xff] %v722
    %920 = vst [vmem:[#allocation7 + $0xd0] sm:$0xff] %v727
    %921 = vst [vmem:[#allocation7 + $0xd8] sm:$0xff] %v730
    %922 = vst [vmem:[#allocation7 + $0xe0] sm:$0xff] %v735
    %923 = vst [vmem:[#allocation7 + $0xe8] sm:$0xff] %v738
    %924 = vst [vmem:[#allocation7 + $0xf0] sm:$0xff] %v743
    %925 = vst [vmem:[#allocation7 + $0xf8] sm:$0xff] %v746
    %926 = vst [vmem:[#allocation7 + $0x100] sm:$0xff] %v832
    %927 = vst [vmem:[#allocation7 + $0x108] sm:$0xff] %v835
    %928 = vst [vmem:[#allocation7 + $0x110] sm:$0xff] %v840
    %929 = vst [vmem:[#allocation7 + $0x118] sm:$0xff] %v843
    %930 = vst [vmem:[#allocation7 + $0x120] sm:$0xff] %v848
    %931 = vst [vmem:[#allocation7 + $0x128] sm:$0xff] %v851
    %932 = vst [vmem:[#allocation7 + $0x130] sm:$0xff] %v856
    %933 = vst [vmem:[#allocation7 + $0x138] sm:$0xff] %v859
    %934 = vst [vmem:[#allocation7 + $0x140] sm:$0xff] %v864
    %935 = vst [vmem:[#allocation7 + $0x148] sm:$0xff] %v867
    %936 = vst [vmem:[#allocation7 + $0x150] sm:$0xff] %v872
    %937 = vst [vmem:[#allocation7 + $0x158] sm:$0xff] %v875
    %938 = vst [vmem:[#allocation7 + $0x160] sm:$0xff] %v880
    %939 = vst [vmem:[#allocation7 + $0x168] sm:$0xff] %v883
    %940 = vst [vmem:[#allocation7 + $0x170] sm:$0xff] %v888
    %941 = vst [vmem:[#allocation7 + $0x178] sm:$0xff] %v891
    // Predicated region
    $region18: #{tpu_custom_call.1} parent=1 // pred_check
      _
    $region19: #{tpu_custom_call.1} parent=1 // pred_check_branch
      %943 = sbr.rel (0) target = $region21
    $region20: #{tpu_custom_call.1} parent=1 // pred_region
      %s945 = ssub.s32 6144, 6144
      %946 = vsyncadd [#allocation4], %s945
      %s947 = sshll.u32 [#allocation7], 4
      %s948 = int_to_ptr.vmem [resolvable:$true] %s947
      %953 = dma.vmem_to_hbm [thread:$0]  %s948, 6144, %s2, [#allocation4], 128, 128, 8
    $region21: #{tpu_custom_call.1} parent=1 // pred_fallthru
      _
    // Predicated region
    $region22: #{tpu_custom_call.1} parent=1 // pred_check
      _
    $region23: #{tpu_custom_call.1} parent=1 // pred_check_branch
      %955 = sbr.rel (0) target = $region25
    $region24: #{tpu_custom_call.1} parent=1 // pred_region
      %956 = dma.done [#allocation4], 6144
    $region25: #{tpu_custom_call.1} parent=1 // pred_fallthru
      _
    %957 = vsyncpa [#allocation3], 1
    %958 = vsyncpa [#allocation6], 1
    %959 = vsyncpa [#allocation4], 1

</llo_original>
